<compile_context>
chip_gen: v7x
topology: tpu7x:2x2x1
jax: 0.10.0
libtpu: 0.0.40
codegen_flags: <defaults>
</compile_context>

<pallas_src>
import functools

import jax
import jax.numpy as jnp
from jax.experimental import pallas as pl
from jax.experimental.pallas import tpu as pltpu

_LANES = 128
_NUM_CORES = 2                           # v7x has 2 TensorCores; harmless on v5e/v6e
_TILE_BYTES_TARGET = 4 * 1024 * 1024     # lane-padded VMEM bytes per streamed tensor per step


def _fastspeech_loss_kernel(
    mel_ref, postnet_ref, mel_tgt_ref,
    dur_pred_ref, dur_tgt_ref,
    energy_pred_ref, energy_tgt_ref,
    pitch_pred_ref, pitch_tgt_ref,
    out_ref,
    acc_mel_ref, acc_post_ref,
    *, rows, tiles_per_core,
):
    # out_ref block: (1, 5, 8, C) f32 per core:
    #   [0,0] mel SSE partial accumulator, [0,1] postnet SSE partial accumulator,
    #   [0,2] sum|dur diff| (broadcast),   [0,3] energy SSE (broadcast),
    #   [0,4] pitch SSE (broadcast).
    c = pl.program_id(0)
    i = pl.program_id(1)
    last = pl.num_programs(1) - 1

    @pl.when(i == 0)
    def _init():
        acc_mel_ref[...] = jnp.zeros_like(acc_mel_ref)
        acc_post_ref[...] = jnp.zeros_like(acc_post_ref)

    tile_rows, cols = mel_ref.shape

    # Mask rows past the true end of this core's logical tile (handles the
    # ragged tail and fully-idle tiles on the second core).  Pure VPU work;
    # the kernel is HBM-bound so this is free.
    row_start = (c * tiles_per_core + i) * tile_rows
    valid = rows - row_start
    row_idx = jax.lax.broadcasted_iota(jnp.int32, (tile_rows, cols), 0)
    mask = row_idx < valid

    # ---- mel / postnet MSE partial sums (VPU-only adds, no per-step XLU) ----
    tgt = mel_tgt_ref[...].astype(jnp.float32)

    d = mel_ref[...].astype(jnp.float32) - tgt
    dsq = jnp.where(mask, d * d, 0.0)
    acc_mel_ref[...] += jnp.sum(dsq.reshape(tile_rows // 8, 8, cols), axis=0)

    d = postnet_ref[...].astype(jnp.float32) - tgt
    dsq = jnp.where(mask, d * d, 0.0)
    acc_post_ref[...] += jnp.sum(dsq.reshape(tile_rows // 8, 8, cols), axis=0)

    # ---- epilogue: dump partials + small resident tensors (once per core) ----
    @pl.when(i == last)
    def _finalize():
        out_ref[0, 0] = acc_mel_ref[...]
        out_ref[0, 1] = acc_post_ref[...]

        # L1(duration_predicted, duration_predictor_target.float())
        dd = dur_pred_ref[...].astype(jnp.float32) - dur_tgt_ref[...].astype(jnp.float32)
        out_ref[0, 2] = jnp.full((8, cols), jnp.sum(jnp.abs(dd)), jnp.float32)

        # MSE(energy_predicted, energy_target)
        de = energy_pred_ref[...].astype(jnp.float32) - energy_tgt_ref[...].astype(jnp.float32)
        out_ref[0, 3] = jnp.full((8, cols), jnp.sum(de * de), jnp.float32)

        # MSE(pitch_predicted, pitch_target)
        dp = pitch_pred_ref[...].astype(jnp.float32) - pitch_tgt_ref[...].astype(jnp.float32)
        out_ref[0, 4] = jnp.full((8, cols), jnp.sum(dp * dp), jnp.float32)


def _as_2d(x):
    """Free (copy-less) 2-D row-tileable view of a contiguous array."""
    n = x.size
    if n % _LANES == 0:
        return x.reshape(n // _LANES, _LANES)      # fully lane-dense
    if x.ndim >= 2:
        return x.reshape(-1, x.shape[-1])          # natural view, last dim = full M
    return x.reshape(1, n)


@jax.jit
def fastspeech_loss(
    mel, postnet, duration_predicted, mel_target,
    duration_predictor_target, energy_predicted, energy_target,
    pitch_predicted, pitch_target,
):
    """Returns (mel_loss, postnet_loss, duration_predictor_loss, energy_loss, pitch_loss)."""
    assert mel.shape == postnet.shape == mel_target.shape
    n_mel = mel.size

    mel2 = _as_2d(mel)
    post2 = _as_2d(postnet)
    tgt2 = _as_2d(mel_target)
    rows, cols = mel2.shape

    # Tile sizing: ~4 MiB of lane-padded VMEM per streamed tensor per step,
    # multiple of 8 rows, never larger than the (rounded-up) row count.
    padded_cols = pl.cdiv(cols, _LANES) * _LANES
    budget_rows = max(8, (_TILE_BYTES_TARGET // (padded_cols * 4)) // 8 * 8)
    tile_rows = min(budget_rows, pl.cdiv(rows, 8) * 8)
    total_tiles = pl.cdiv(rows, tile_rows)
    tiles_per_core = pl.cdiv(total_tiles, _NUM_CORES)

    def big_map(c, i):
        rb = c * tiles_per_core + i
        # Clamp idle tiles (second core's overhang) to a valid block; their
        # contribution is zeroed by the in-kernel row mask.
        return (jnp.minimum(rb, total_tiles - 1), 0)

    big_spec = pl.BlockSpec((tile_rows, cols), big_map)

    def resident_spec(x):
        nd = x.ndim
        return pl.BlockSpec(x.shape, lambda c, i: (0,) * nd)   # whole-array, stays resident

    small = (duration_predicted, duration_predictor_target,
             energy_predicted, energy_target,
             pitch_predicted, pitch_target)

    kernel = functools.partial(_fastspeech_loss_kernel,
                               rows=rows, tiles_per_core=tiles_per_core)

    bytes_accessed = 3 * n_mel * mel.dtype.itemsize
    bytes_accessed += sum(int(s.size) * s.dtype.itemsize for s in small)
    bytes_accessed += _NUM_CORES * 5 * 8 * cols * 4

    out = pl.pallas_call(
        kernel,
        out_shape=jax.ShapeDtypeStruct((_NUM_CORES, 5, 8, cols), jnp.float32),
        grid=(_NUM_CORES, tiles_per_core),
        in_specs=[big_spec, big_spec, big_spec] + [resident_spec(s) for s in small],
        out_specs=pl.BlockSpec((1, 5, 8, cols), lambda c, i: (c, 0, 0, 0)),
        scratch_shapes=[
            pltpu.VMEM((8, cols), jnp.float32),  # mel MSE partial sums (per core)
            pltpu.VMEM((8, cols), jnp.float32),  # postnet MSE partial sums (per core)
        ],
        compiler_params=pltpu.CompilerParams(
            dimension_semantics=("parallel", "arbitrary"),  # cores x reduction steps
            vmem_limit_bytes=40 * 1024 * 1024,              # ~24 MiB working set + headroom
        ),
        cost_estimate=pl.CostEstimate(
            flops=8 * n_mel, transcendentals=0, bytes_accessed=int(bytes_accessed)),
    )(mel2, post2, tgt2, *small)

    # Combine per-core partial sums; divide by the true element counts.
    mel_loss = jnp.sum(out[:, 0]) / n_mel
    postnet_loss = jnp.sum(out[:, 1]) / n_mel
    duration_loss = out[0, 2, 0, 0] / duration_predicted.size
    energy_loss = out[0, 3, 0, 0] / energy_predicted.size
    pitch_loss = out[0, 4, 0, 0] / pitch_predicted.size
    return mel_loss, postnet_loss, duration_loss, energy_loss, pitch_loss


if __name__ == "__main__":
    key = jax.random.PRNGKey(0)
    B, T, M = 2, 8, 32  # batch, sequence, mel channels

    keys = jax.random.split(key, 9)
    mel = jax.random.normal(keys[0], (B, T, M), dtype=jnp.float32)
    postnet = jax.random.normal(keys[1], (B, T, M), dtype=jnp.float32)
    mel_target = jax.random.normal(keys[2], (B, T, M), dtype=jnp.float32)
    duration_predicted = jax.random.normal(keys[3], (B, T), dtype=jnp.float32)
    # duration target is integer-valued (exercises the .float() cast)
    duration_predictor_target = jax.random.randint(keys[4], (B, T), 0, 10, dtype=jnp.int32)
    energy_predicted = jax.random.normal(keys[5], (B, T), dtype=jnp.float32)
    energy_target = jax.random.normal(keys[6], (B, T), dtype=jnp.float32)
    pitch_predicted = jax.random.normal(keys[7], (B, T), dtype=jnp.float32)
    pitch_target = jax.random.normal(keys[8], (B, T), dtype=jnp.float32)

    losses = fastspeech_loss(
        mel, postnet, duration_predicted, mel_target,
        duration_predictor_target, energy_predicted, energy_target,
        pitch_predicted, pitch_target,
    )
    losses = jax.block_until_ready(losses)

    # Pure-JAX reference check.
    ref = (
        jnp.mean((mel - mel_target) ** 2),
        jnp.mean((postnet - mel_target) ** 2),
        jnp.mean(jnp.abs(duration_predicted - duration_predictor_target.astype(jnp.float32))),
        jnp.mean((energy_predicted - energy_target) ** 2),
        jnp.mean((pitch_predicted - pitch_target) ** 2),
    )
    for got, want in zip(losses, ref):
        assert jnp.allclose(got, want, rtol=1e-5, atol=1e-6), (got, want)

    print("KERNEL_OK")
</pallas_src>

<mosaic_0001>
module attributes {stable_mosaic.version = 11 : i64} {
  func.func @_fastspeech_loss_kernel(%arg0: i32, %arg1: i32, %arg2: memref<8x128xf32, #tpu.memory_space<vmem>>, %arg3: memref<8x128xf32, #tpu.memory_space<vmem>>, %arg4: memref<8x128xf32, #tpu.memory_space<vmem>>, %arg5: memref<2x8xf32, #tpu.memory_space<vmem>>, %arg6: memref<2x8xi32, #tpu.memory_space<vmem>>, %arg7: memref<2x8xf32, #tpu.memory_space<vmem>>, %arg8: memref<2x8xf32, #tpu.memory_space<vmem>>, %arg9: memref<2x8xf32, #tpu.memory_space<vmem>>, %arg10: memref<2x8xf32, #tpu.memory_space<vmem>>, %arg11: memref<1x5x8x128xf32, #tpu.memory_space<vmem>>, %arg12: memref<8x128xf32, #tpu.memory_space<vmem>>, %arg13: memref<8x128xf32, #tpu.memory_space<vmem>>) attributes {dimension_semantics = [#tpu.dimension_semantics<parallel>, #tpu.dimension_semantics<arbitrary>], iteration_bounds = array<i64: 2, 1>, scalar_prefetch = 0 : i64, scratch_operands = 2 : i64, tpu.core_type = #tpu.core_type<tc>, window_params = [{transform_indices = @transform_0, window_bounds = array<i64: 8, 128>}, {transform_indices = @transform_1, window_bounds = array<i64: 8, 128>}, {transform_indices = @transform_2, window_bounds = array<i64: 8, 128>}, {pipeline_mode = #tpu.pipeline_mode<synchronous>, transform_indices = @transform_3, window_bounds = array<i64: 2, 8>}, {pipeline_mode = #tpu.pipeline_mode<synchronous>, transform_indices = @transform_4, window_bounds = array<i64: 2, 8>}, {pipeline_mode = #tpu.pipeline_mode<synchronous>, transform_indices = @transform_5, window_bounds = array<i64: 2, 8>}, {pipeline_mode = #tpu.pipeline_mode<synchronous>, transform_indices = @transform_6, window_bounds = array<i64: 2, 8>}, {pipeline_mode = #tpu.pipeline_mode<synchronous>, transform_indices = @transform_7, window_bounds = array<i64: 2, 8>}, {pipeline_mode = #tpu.pipeline_mode<synchronous>, transform_indices = @transform_8, window_bounds = array<i64: 2, 8>}, {transform_indices = @transform_9, window_bounds = array<i64: 1, 5, 8, 128>}]} {
    %c0_i32 = arith.constant 0 : i32
    %0 = arith.cmpi eq, %arg1, %c0_i32 : i32
    %1 = arith.extui %0 : i1 to i32
    %c0_i32_0 = arith.constant 0 : i32
    %2 = arith.cmpi ne, %1, %c0_i32_0 : i32
    scf.if %2 {
      %cst_19 = arith.constant 0.000000e+00 : f32
      %34 = vector.broadcast %cst_19 : f32 to vector<8x128xf32>
      %c0_20 = arith.constant 0 : index
      %c0_21 = arith.constant 0 : index
      %35 = vector.load %arg12[%c0_20, %c0_21] : memref<8x128xf32, #tpu.memory_space<vmem>>, vector<8x128xf32>
      tpu.vector_store %arg12[%c0_20, %c0_21], %34 {strides = array<i32>} : memref<8x128xf32, #tpu.memory_space<vmem>>, vector<8x128xf32>,
      %cst_22 = arith.constant 0.000000e+00 : f32
      %36 = vector.broadcast %cst_22 : f32 to vector<8x128xf32>
      %c0_23 = arith.constant 0 : index
      %c0_24 = arith.constant 0 : index
      %37 = vector.load %arg13[%c0_23, %c0_24] : memref<8x128xf32, #tpu.memory_space<vmem>>, vector<8x128xf32>
      tpu.vector_store %arg13[%c0_23, %c0_24], %36 {strides = array<i32>} : memref<8x128xf32, #tpu.memory_space<vmem>>, vector<8x128xf32>,
    } else {
    }
    %c1_i32 = arith.constant 1 : i32
    %3 = arith.muli %arg0, %c1_i32 : i32
    %4 = arith.addi %3, %arg1 : i32
    %c8_i32 = arith.constant 8 : i32
    %5 = arith.muli %4, %c8_i32 : i32
    %c4_i32 = arith.constant 4 : i32
    %6 = arith.subi %c4_i32, %5 : i32
    %7 = tpu.iota {dimensions = array<i32: 0>} : vector<8x128xi32>
    %8 = vector.broadcast %6 : i32 to vector<8x128xi32>
    %9 = arith.cmpi slt, %7, %8 : vector<8x128xi32>
    %c0 = arith.constant 0 : index
    %c0_1 = arith.constant 0 : index
    %10 = vector.load %arg4[%c0, %c0_1] : memref<8x128xf32, #tpu.memory_space<vmem>>, vector<8x128xf32>
    %c0_2 = arith.constant 0 : index
    %c0_3 = arith.constant 0 : index
    %11 = vector.load %arg2[%c0_2, %c0_3] : memref<8x128xf32, #tpu.memory_space<vmem>>, vector<8x128xf32>
    %12 = arith.subf %11, %10 : vector<8x128xf32>
    %13 = arith.mulf %12, %12 : vector<8x128xf32>
    %cst = arith.constant 0.000000e+00 : f32
    %14 = vector.broadcast %cst : f32 to vector<8x128xf32>
    %15 = arith.select %9, %13, %14 : vector<8x128xi1>, vector<8x128xf32>
    %c0_4 = arith.constant 0 : index
    %c0_5 = arith.constant 0 : index
    %16 = vector.load %arg12[%c0_4, %c0_5] : memref<8x128xf32, #tpu.memory_space<vmem>>, vector<8x128xf32>
    %17 = vector.shape_cast %15 : vector<8x128xf32> to vector<1x8x128xf32>
    %cst_6 = arith.constant dense<0.000000e+00> : vector<8x128xf32>
    %18 = vector.multi_reduction <add>, %17, %cst_6 [0] : vector<1x8x128xf32> to vector<8x128xf32>
    %19 = arith.addf %16, %18 : vector<8x128xf32>
    %c0_7 = arith.constant 0 : index
    %c0_8 = arith.constant 0 : index
    %20 = vector.load %arg12[%c0_7, %c0_8] : memref<8x128xf32, #tpu.memory_space<vmem>>, vector<8x128xf32>
    tpu.vector_store %arg12[%c0_7, %c0_8], %19 {strides = array<i32>} : memref<8x128xf32, #tpu.memory_space<vmem>>, vector<8x128xf32>,
    %c0_9 = arith.constant 0 : index
    %c0_10 = arith.constant 0 : index
    %21 = vector.load %arg3[%c0_9, %c0_10] : memref<8x128xf32, #tpu.memory_space<vmem>>, vector<8x128xf32>
    %22 = arith.subf %21, %10 : vector<8x128xf32>
    %23 = arith.mulf %22, %22 : vector<8x128xf32>
    %cst_11 = arith.constant 0.000000e+00 : f32
    %24 = vector.broadcast %cst_11 : f32 to vector<8x128xf32>
    %25 = arith.select %9, %23, %24 : vector<8x128xi1>, vector<8x128xf32>
    %c0_12 = arith.constant 0 : index
    %c0_13 = arith.constant 0 : index
    %26 = vector.load %arg13[%c0_12, %c0_13] : memref<8x128xf32, #tpu.memory_space<vmem>>, vector<8x128xf32>
    %27 = vector.shape_cast %25 : vector<8x128xf32> to vector<1x8x128xf32>
    %cst_14 = arith.constant dense<0.000000e+00> : vector<8x128xf32>
    %28 = vector.multi_reduction <add>, %27, %cst_14 [0] : vector<1x8x128xf32> to vector<8x128xf32>
    %29 = arith.addf %26, %28 : vector<8x128xf32>
    %c0_15 = arith.constant 0 : index
    %c0_16 = arith.constant 0 : index
    %30 = vector.load %arg13[%c0_15, %c0_16] : memref<8x128xf32, #tpu.memory_space<vmem>>, vector<8x128xf32>
    tpu.vector_store %arg13[%c0_15, %c0_16], %29 {strides = array<i32>} : memref<8x128xf32, #tpu.memory_space<vmem>>, vector<8x128xf32>,
    %c0_i32_17 = arith.constant 0 : i32
    %31 = arith.cmpi eq, %arg1, %c0_i32_17 : i32
    %32 = arith.extui %31 : i1 to i32
    %c0_i32_18 = arith.constant 0 : i32
    %33 = arith.cmpi ne, %32, %c0_i32_18 : i32
    scf.if %33 {
      %c0_19 = arith.constant 0 : index
      %c0_20 = arith.constant 0 : index
      %34 = vector.load %arg12[%c0_19, %c0_20] : memref<8x128xf32, #tpu.memory_space<vmem>>, vector<8x128xf32>
      %c0_21 = arith.constant 0 : index
      %c0_22 = arith.constant 0 : index
      %c0_23 = arith.constant 0 : index
      %c0_24 = arith.constant 0 : index
      %35 = vector.load %arg11[%c0_21, %c0_22, %c0_23, %c0_24] : memref<1x5x8x128xf32, #tpu.memory_space<vmem>>, vector<1x1x8x128xf32>
      %36 = vector.shape_cast %35 : vector<1x1x8x128xf32> to vector<8x128xf32>
      %37 = vector.shape_cast %34 : vector<8x128xf32> to vector<1x1x8x128xf32>
      tpu.vector_store %arg11[%c0_21, %c0_22, %c0_23, %c0_24], %37 {strides = array<i32>} : memref<1x5x8x128xf32, #tpu.memory_space<vmem>>, vector<1x1x8x128xf32>,
      %c0_25 = arith.constant 0 : index
      %c0_26 = arith.constant 0 : index
      %38 = vector.load %arg13[%c0_25, %c0_26] : memref<8x128xf32, #tpu.memory_space<vmem>>, vector<8x128xf32>
      %c0_27 = arith.constant 0 : index
      %c1 = arith.constant 1 : index
      %c0_28 = arith.constant 0 : index
      %c0_29 = arith.constant 0 : index
      %39 = vector.load %arg11[%c0_27, %c1, %c0_28, %c0_29] : memref<1x5x8x128xf32, #tpu.memory_space<vmem>>, vector<1x1x8x128xf32>
      %40 = vector.shape_cast %39 : vector<1x1x8x128xf32> to vector<8x128xf32>
      %41 = vector.shape_cast %38 : vector<8x128xf32> to vector<1x1x8x128xf32>
      tpu.vector_store %arg11[%c0_27, %c1, %c0_28, %c0_29], %41 {strides = array<i32>} : memref<1x5x8x128xf32, #tpu.memory_space<vmem>>, vector<1x1x8x128xf32>,
      %c0_30 = arith.constant 0 : index
      %c0_31 = arith.constant 0 : index
      %42 = vector.load %arg5[%c0_30, %c0_31] : memref<2x8xf32, #tpu.memory_space<vmem>>, vector<2x8xf32>
      %c0_32 = arith.constant 0 : index
      %c0_33 = arith.constant 0 : index
      %43 = vector.load %arg6[%c0_32, %c0_33] : memref<2x8xi32, #tpu.memory_space<vmem>>, vector<2x8xi32>
      %44 = arith.sitofp %43 : vector<2x8xi32> to vector<2x8xf32>
      %45 = arith.subf %42, %44 : vector<2x8xf32>
      %46 = math.absf %45 : vector<2x8xf32>
      %47 = vector.shape_cast %46 : vector<2x8xf32> to vector<1x2x8xf32>
      %cst_34 = arith.constant dense<0.000000e+00> : vector<1xf32>
      %48 = vector.multi_reduction <add>, %47, %cst_34 [1, 2] : vector<1x2x8xf32> to vector<1xf32>
      %49 = vector.shape_cast %48 : vector<1xf32> to vector<1x1x1xf32>
      %50 = vector.extract %49[0, 0, 0] : f32 from vector<1x1x1xf32>
      %51 = vector.broadcast %50 : f32 to vector<8x128xf32>
      %c0_35 = arith.constant 0 : index
      %c2 = arith.constant 2 : index
      %c0_36 = arith.constant 0 : index
      %c0_37 = arith.constant 0 : index
      %52 = vector.load %arg11[%c0_35, %c2, %c0_36, %c0_37] : memref<1x5x8x128xf32, #tpu.memory_space<vmem>>, vector<1x1x8x128xf32>
      %53 = vector.shape_cast %52 : vector<1x1x8x128xf32> to vector<8x128xf32>
      %54 = vector.shape_cast %51 : vector<8x128xf32> to vector<1x1x8x128xf32>
      tpu.vector_store %arg11[%c0_35, %c2, %c0_36, %c0_37], %54 {strides = array<i32>} : memref<1x5x8x128xf32, #tpu.memory_space<vmem>>, vector<1x1x8x128xf32>,
      %c0_38 = arith.constant 0 : index
      %c0_39 = arith.constant 0 : index
      %55 = vector.load %arg7[%c0_38, %c0_39] : memref<2x8xf32, #tpu.memory_space<vmem>>, vector<2x8xf32>
      %c0_40 = arith.constant 0 : index
      %c0_41 = arith.constant 0 : index
      %56 = vector.load %arg8[%c0_40, %c0_41] : memref<2x8xf32, #tpu.memory_space<vmem>>, vector<2x8xf32>
      %57 = arith.subf %55, %56 : vector<2x8xf32>
      %58 = arith.mulf %57, %57 : vector<2x8xf32>
      %59 = vector.shape_cast %58 : vector<2x8xf32> to vector<1x2x8xf32>
      %cst_42 = arith.constant dense<0.000000e+00> : vector<1xf32>
      %60 = vector.multi_reduction <add>, %59, %cst_42 [1, 2] : vector<1x2x8xf32> to vector<1xf32>
      %61 = vector.shape_cast %60 : vector<1xf32> to vector<1x1x1xf32>
      %62 = vector.extract %61[0, 0, 0] : f32 from vector<1x1x1xf32>
      %63 = vector.broadcast %62 : f32 to vector<8x128xf32>
      %c0_43 = arith.constant 0 : index
      %c3 = arith.constant 3 : index
      %c0_44 = arith.constant 0 : index
      %c0_45 = arith.constant 0 : index
      %64 = vector.load %arg11[%c0_43, %c3, %c0_44, %c0_45] : memref<1x5x8x128xf32, #tpu.memory_space<vmem>>, vector<1x1x8x128xf32>
      %65 = vector.shape_cast %64 : vector<1x1x8x128xf32> to vector<8x128xf32>
      %66 = vector.shape_cast %63 : vector<8x128xf32> to vector<1x1x8x128xf32>
      tpu.vector_store %arg11[%c0_43, %c3, %c0_44, %c0_45], %66 {strides = array<i32>} : memref<1x5x8x128xf32, #tpu.memory_space<vmem>>, vector<1x1x8x128xf32>,
      %c0_46 = arith.constant 0 : index
      %c0_47 = arith.constant 0 : index
      %67 = vector.load %arg9[%c0_46, %c0_47] : memref<2x8xf32, #tpu.memory_space<vmem>>, vector<2x8xf32>
      %c0_48 = arith.constant 0 : index
      %c0_49 = arith.constant 0 : index
      %68 = vector.load %arg10[%c0_48, %c0_49] : memref<2x8xf32, #tpu.memory_space<vmem>>, vector<2x8xf32>
      %69 = arith.subf %67, %68 : vector<2x8xf32>
      %70 = arith.mulf %69, %69 : vector<2x8xf32>
      %71 = vector.shape_cast %70 : vector<2x8xf32> to vector<1x2x8xf32>
      %cst_50 = arith.constant dense<0.000000e+00> : vector<1xf32>
      %72 = vector.multi_reduction <add>, %71, %cst_50 [1, 2] : vector<1x2x8xf32> to vector<1xf32>
      %73 = vector.shape_cast %72 : vector<1xf32> to vector<1x1x1xf32>
      %74 = vector.extract %73[0, 0, 0] : f32 from vector<1x1x1xf32>
      %75 = vector.broadcast %74 : f32 to vector<8x128xf32>
      %c0_51 = arith.constant 0 : index
      %c4 = arith.constant 4 : index
      %c0_52 = arith.constant 0 : index
      %c0_53 = arith.constant 0 : index
      %76 = vector.load %arg11[%c0_51, %c4, %c0_52, %c0_53] : memref<1x5x8x128xf32, #tpu.memory_space<vmem>>, vector<1x1x8x128xf32>
      %77 = vector.shape_cast %76 : vector<1x1x8x128xf32> to vector<8x128xf32>
      %78 = vector.shape_cast %75 : vector<8x128xf32> to vector<1x1x8x128xf32>
      tpu.vector_store %arg11[%c0_51, %c4, %c0_52, %c0_53], %78 {strides = array<i32>} : memref<1x5x8x128xf32, #tpu.memory_space<vmem>>, vector<1x1x8x128xf32>,
    } else {
    }
    return
  }
  func.func @transform_0(%arg0: i32, %arg1: i32) -> (i32, i32) {
    %c1_i32 = arith.constant 1 : i32
    %0 = arith.muli %arg0, %c1_i32 : i32
    %1 = arith.addi %0, %arg1 : i32
    %c0_i32 = arith.constant 0 : i32
    %2 = arith.minsi %1, %c0_i32 : i32
    %c0_i32_0 = arith.constant 0 : i32
    %c0_i32_1 = arith.constant 0 : i32
    return %2, %c0_i32_0 : i32, i32
  }
  func.func @transform_1(%arg0: i32, %arg1: i32) -> (i32, i32) {
    %c1_i32 = arith.constant 1 : i32
    %0 = arith.muli %arg0, %c1_i32 : i32
    %1 = arith.addi %0, %arg1 : i32
    %c0_i32 = arith.constant 0 : i32
    %2 = arith.minsi %1, %c0_i32 : i32
    %c0_i32_0 = arith.constant 0 : i32
    %c0_i32_1 = arith.constant 0 : i32
    return %2, %c0_i32_0 : i32, i32
  }
  func.func @transform_2(%arg0: i32, %arg1: i32) -> (i32, i32) {
    %c1_i32 = arith.constant 1 : i32
    %0 = arith.muli %arg0, %c1_i32 : i32
    %1 = arith.addi %0, %arg1 : i32
    %c0_i32 = arith.constant 0 : i32
    %2 = arith.minsi %1, %c0_i32 : i32
    %c0_i32_0 = arith.constant 0 : i32
    %c0_i32_1 = arith.constant 0 : i32
    return %2, %c0_i32_0 : i32, i32
  }
  func.func @transform_3(%arg0: i32, %arg1: i32) -> (i32, i32) {
    %c0_i32 = arith.constant 0 : i32
    %c0_i32_0 = arith.constant 0 : i32
    %c0_i32_1 = arith.constant 0 : i32
    return %c0_i32, %c0_i32_0 : i32, i32
  }
  func.func @transform_4(%arg0: i32, %arg1: i32) -> (i32, i32) {
    %c0_i32 = arith.constant 0 : i32
    %c0_i32_0 = arith.constant 0 : i32
    %c0_i32_1 = arith.constant 0 : i32
    return %c0_i32, %c0_i32_0 : i32, i32
  }
  func.func @transform_5(%arg0: i32, %arg1: i32) -> (i32, i32) {
    %c0_i32 = arith.constant 0 : i32
    %c0_i32_0 = arith.constant 0 : i32
    %c0_i32_1 = arith.constant 0 : i32
    return %c0_i32, %c0_i32_0 : i32, i32
  }
  func.func @transform_6(%arg0: i32, %arg1: i32) -> (i32, i32) {
    %c0_i32 = arith.constant 0 : i32
    %c0_i32_0 = arith.constant 0 : i32
    %c0_i32_1 = arith.constant 0 : i32
    return %c0_i32, %c0_i32_0 : i32, i32
  }
  func.func @transform_7(%arg0: i32, %arg1: i32) -> (i32, i32) {
    %c0_i32 = arith.constant 0 : i32
    %c0_i32_0 = arith.constant 0 : i32
    %c0_i32_1 = arith.constant 0 : i32
    return %c0_i32, %c0_i32_0 : i32, i32
  }
  func.func @transform_8(%arg0: i32, %arg1: i32) -> (i32, i32) {
    %c0_i32 = arith.constant 0 : i32
    %c0_i32_0 = arith.constant 0 : i32
    %c0_i32_1 = arith.constant 0 : i32
    return %c0_i32, %c0_i32_0 : i32, i32
  }
  func.func @transform_9(%arg0: i32, %arg1: i32) -> (i32, i32, i32, i32) {
    %c0_i32 = arith.constant 0 : i32
    %c0_i32_0 = arith.constant 0 : i32
    %c0_i32_1 = arith.constant 0 : i32
    %c0_i32_2 = arith.constant 0 : i32
    return %arg0, %c0_i32, %c0_i32_0, %c0_i32_1 : i32, i32, i32, i32
  }
}

</mosaic_0001>

<llo_original>
// kernel: fastspeech_loss.1
$region0: #{fastspeech_loss.1}
  #allocation0 [shape = 'u32[]', space=smem, size = 0x4, offset = 0x4, fixed_abs, tag = 'smem constant byte address 0x4 - core index']
  #allocation1 [shape = 'u32[144,128]{1,0:T(1,128)}', space=vmem, size = 0x12000, scoped, tag = 'internal scratch']
  #allocation2 [shape = 'f32[8,128]{1,0:T(8,128)}', space=vmem, size = 0x1000, scoped, tag = 'scratch operand']
  #allocation3 [shape = 'f32[8,128]{1,0:T(8,128)}', space=vmem, size = 0x1000, scoped, tag = 'scratch operand']
  %s0 = inlined_call_operand.vmem [shape: f32[4,128], index: 0, kind: input, shape index: {}]
  %s1 = inlined_call_operand.vmem [shape: f32[4,128], index: 1, kind: input, shape index: {}]
  %s2 = inlined_call_operand.vmem [shape: f32[4,128], index: 2, kind: input, shape index: {}]
  %s3 = inlined_call_operand.vmem [shape: f32[2,8], index: 3, kind: input, shape index: {}]
  %s4 = inlined_call_operand.vmem [shape: s32[2,8], index: 4, kind: input, shape index: {}]
  %s5 = inlined_call_operand.vmem [shape: f32[2,8], index: 5, kind: input, shape index: {}]
  %s6 = inlined_call_operand.vmem [shape: f32[2,8], index: 6, kind: input, shape index: {}]
  %s7 = inlined_call_operand.vmem [shape: f32[2,8], index: 7, kind: input, shape index: {}]
  %s8 = inlined_call_operand.vmem [shape: f32[2,8], index: 8, kind: input, shape index: {}]
  %s9 = inlined_call_operand.vmem [shape: f32[2,5,8,128], index: 9, kind: output, shape index: {}]
  %s10 = sld [smem:[#allocation0]]
  $region77: #{fastspeech_loss.1} parent=0
    _
  %s12 = ssub.s32 1, %s10
  %s13 = scalar_select 0, %s12, %s10
  loop: start=0, step=1, limit=4
  $region2: #{fastspeech_loss.1} parent=0 // loop_pre_header
    _
  $region3: #{fastspeech_loss.1} parent=0 // loop_header
    %s15 = sphi 0, %s19
    %p16 = scmp.ge.s32.totalorder %s15, 4
    %s22 = sphi 0, %s34
    %s23 = sphi 0, %s30
    %s24 = sphi 0, %s22
    %s25 = sphi 0, %s23
    %s26 = sphi 0, %s24
    %s27 = sphi 0, %s25
    %s43 = sphi 0, %s45
    %s46 = sphi 0, %s43
    %s47 = sphi 0, %s46
    %s63 = sphi 0, %s47
    %s75 = sphi 0, %s77
    %s78 = sphi 0, %s75
    %s79 = sphi 0, %s78
    %s95 = sphi 0, %s79
    %s107 = sphi 0, %s109
    %s110 = sphi 0, %s107
    %s111 = sphi 0, %s110
    %s127 = sphi 0, %s111
    %s131 = sphi 0, %s131
    %s133 = sphi 0, %s131
    %s134 = sphi 0, %s133
    %s148 = sphi 0, %s134
    %s152 = sphi 0, %s152
    %s154 = sphi 0, %s152
    %s155 = sphi 0, %s154
    %s169 = sphi 0, %s155
    %s173 = sphi 0, %s173
    %s175 = sphi 0, %s173
    %s176 = sphi 0, %s175
    %s190 = sphi 0, %s176
    %s194 = sphi 0, %s194
    %s196 = sphi 0, %s194
    %s197 = sphi 0, %s196
    %s211 = sphi 0, %s197
    %s215 = sphi 0, %s215
    %s217 = sphi 0, %s215
    %s218 = sphi 0, %s217
    %s232 = sphi 0, %s218
    %s236 = sphi 0, %s236
    %s238 = sphi 0, %s236
    %s239 = sphi 0, %s238
    %s253 = sphi 0, %s239
    %s259 = sphi 0, %s261
    %s262 = sphi 0, %s259
    %s263 = sphi 0, %s262
    %s279 = sphi 0, %s263
  $region4: #{fastspeech_loss.1} parent=0 // loop_header_branch
    %18 = sbr.rel (%p16) target = $region8
  $region5: #{fastspeech_loss.1} parent=0 // loop_body
    %s20 = ssub.s32 %s15, 1
    %s21 = ssub.s32 %s15, 2
    %s28 = sadd.s32 1, %s23
    %p29 = scmp.ge.s32.totalorder %s28, 1
    %s30 = scalar_select %p29, 0, %s28
    %s31 = sadd.s32 1, %s22
    %s32 = scalar_select %p29, %s31, %s22
    %p33 = scmp.ge.s32.totalorder %s32, 2
    %s34 = scalar_select %p33, 0, %s32
    %s35 = sadd.s32 %s22, %s23
    %p36 = scmp.lt.s32.totalorder %s35, 0
    %s37 = scalar_select %p36, %s35, 0
    %s38 = sadd.s32 %s34, %s30
    %p39 = scmp.lt.s32.totalorder %s38, 0
    %s40 = scalar_select %p39, %s38, 0
    %s41 = ssub.s32 %s37, %s40
    %p42 = scmp.eq.s32.totalorder %s41, 0
    %s44 = sadd.s32 %s43, 1
    %s45 = scalar_select %p42, %s43, %s44
    %p48 = pneg %p42
    %p49 = scmp.eq.s32.totalorder %s15, 1
    %p50 = por %p48, %p49
    %p51 = scmp.ne.s32.totalorder %s43, %s46
    %p52 = scmp.eq.s32.totalorder %s15, 0
    %p53 = por %p51, %p52
    %p54 = scmp.ne.s32.totalorder %s43, %s46
    %p55 = scmp.eq.s32.totalorder %s20, 1
    %p56 = por %p54, %p55
    %p57 = scmp.ne.s32.totalorder %s46, %s47
    %p58 = scmp.eq.s32.totalorder %s20, 0
    %p59 = por %p57, %p58
    %p60 = scmp.ne.s32.totalorder %s46, %s47
    %p61 = scmp.eq.s32.totalorder %s21, 1
    %p62 = por %p60, %p61
    %p64 = scmp.ne.s32.totalorder %s47, %s63
    %p65 = scmp.eq.s32.totalorder %s21, 0
    %p66 = por %p64, %p65
    %s67 = sadd.s32 %s22, %s23
    %p68 = scmp.lt.s32.totalorder %s67, 0
    %s69 = scalar_select %p68, %s67, 0
    %s70 = sadd.s32 %s34, %s30
    %p71 = scmp.lt.s32.totalorder %s70, 0
    %s72 = scalar_select %p71, %s70, 0
    %s73 = ssub.s32 %s69, %s72
    %p74 = scmp.eq.s32.totalorder %s73, 0
    %s76 = sadd.s32 %s75, 1
    %s77 = scalar_select %p74, %s75, %s76
    %p80 = pneg %p74
    %p81 = scmp.eq.s32.totalorder %s15, 1
    %p82 = por %p80, %p81
    %p83 = scmp.ne.s32.totalorder %s75, %s78
    %p84 = scmp.eq.s32.totalorder %s15, 0
    %p85 = por %p83, %p84
    %p86 = scmp.ne.s32.totalorder %s75, %s78
    %p87 = scmp.eq.s32.totalorder %s20, 1
    %p88 = por %p86, %p87
    %p89 = scmp.ne.s32.totalorder %s78, %s79
    %p90 = scmp.eq.s32.totalorder %s20, 0
    %p91 = por %p89, %p90
    %p92 = scmp.ne.s32.totalorder %s78, %s79
    %p93 = scmp.eq.s32.totalorder %s21, 1
    %p94 = por %p92, %p93
    %p96 = scmp.ne.s32.totalorder %s79, %s95
    %p97 = scmp.eq.s32.totalorder %s21, 0
    %p98 = por %p96, %p97
    %s99 = sadd.s32 %s22, %s23
    %p100 = scmp.lt.s32.totalorder %s99, 0
    %s101 = scalar_select %p100, %s99, 0
    %s102 = sadd.s32 %s34, %s30
    %p103 = scmp.lt.s32.totalorder %s102, 0
    %s104 = scalar_select %p103, %s102, 0
    %s105 = ssub.s32 %s101, %s104
    %p106 = scmp.eq.s32.totalorder %s105, 0
    %s108 = sadd.s32 %s107, 1
    %s109 = scalar_select %p106, %s107, %s108
    %p112 = pneg %p106
    %p113 = scmp.eq.s32.totalorder %s15, 1
    %p114 = por %p112, %p113
    %p115 = scmp.ne.s32.totalorder %s107, %s110
    %p116 = scmp.eq.s32.totalorder %s15, 0
    %p117 = por %p115, %p116
    %p118 = scmp.ne.s32.totalorder %s107, %s110
    %p119 = scmp.eq.s32.totalorder %s20, 1
    %p120 = por %p118, %p119
    %p121 = scmp.ne.s32.totalorder %s110, %s111
    %p122 = scmp.eq.s32.totalorder %s20, 0
    %p123 = por %p121, %p122
    %p124 = scmp.ne.s32.totalorder %s110, %s111
    %p125 = scmp.eq.s32.totalorder %s21, 1
    %p126 = por %p124, %p125
    %p128 = scmp.ne.s32.totalorder %s111, %s127
    %p129 = scmp.eq.s32.totalorder %s21, 0
    %p130 = por %p128, %p129
    %s132 = sadd.s32 %s131, 1
    %p135 = scmp.eq.s32.totalorder %s15, 1
    %p136 = scmp.ne.s32.totalorder %s131, %s133
    %p137 = scmp.eq.s32.totalorder %s15, 0
    %p138 = por %p136, %p137
    %p139 = scmp.ne.s32.totalorder %s131, %s133
    %p140 = scmp.eq.s32.totalorder %s20, 1
    %p141 = por %p139, %p140
    %p142 = scmp.ne.s32.totalorder %s133, %s134
    %p143 = scmp.eq.s32.totalorder %s20, 0
    %p144 = por %p142, %p143
    %p145 = scmp.ne.s32.totalorder %s133, %s134
    %p146 = scmp.eq.s32.totalorder %s21, 1
    %p147 = por %p145, %p146
    %p149 = scmp.ne.s32.totalorder %s134, %s148
    %p150 = scmp.eq.s32.totalorder %s21, 0
    %p151 = por %p149, %p150
    %s153 = sadd.s32 %s152, 1
    %p156 = scmp.eq.s32.totalorder %s15, 1
    %p157 = scmp.ne.s32.totalorder %s152, %s154
    %p158 = scmp.eq.s32.totalorder %s15, 0
    %p159 = por %p157, %p158
    %p160 = scmp.ne.s32.totalorder %s152, %s154
    %p161 = scmp.eq.s32.totalorder %s20, 1
    %p162 = por %p160, %p161
    %p163 = scmp.ne.s32.totalorder %s154, %s155
    %p164 = scmp.eq.s32.totalorder %s20, 0
    %p165 = por %p163, %p164
    %p166 = scmp.ne.s32.totalorder %s154, %s155
    %p167 = scmp.eq.s32.totalorder %s21, 1
    %p168 = por %p166, %p167
    %p170 = scmp.ne.s32.totalorder %s155, %s169
    %p171 = scmp.eq.s32.totalorder %s21, 0
    %p172 = por %p170, %p171
    %s174 = sadd.s32 %s173, 1
    %p177 = scmp.eq.s32.totalorder %s15, 1
    %p178 = scmp.ne.s32.totalorder %s173, %s175
    %p179 = scmp.eq.s32.totalorder %s15, 0
    %p180 = por %p178, %p179
    %p181 = scmp.ne.s32.totalorder %s173, %s175
    %p182 = scmp.eq.s32.totalorder %s20, 1
    %p183 = por %p181, %p182
    %p184 = scmp.ne.s32.totalorder %s175, %s176
    %p185 = scmp.eq.s32.totalorder %s20, 0
    %p186 = por %p184, %p185
    %p187 = scmp.ne.s32.totalorder %s175, %s176
    %p188 = scmp.eq.s32.totalorder %s21, 1
    %p189 = por %p187, %p188
    %p191 = scmp.ne.s32.totalorder %s176, %s190
    %p192 = scmp.eq.s32.totalorder %s21, 0
    %p193 = por %p191, %p192
    %s195 = sadd.s32 %s194, 1
    %p198 = scmp.eq.s32.totalorder %s15, 1
    %p199 = scmp.ne.s32.totalorder %s194, %s196
    %p200 = scmp.eq.s32.totalorder %s15, 0
    %p201 = por %p199, %p200
    %p202 = scmp.ne.s32.totalorder %s194, %s196
    %p203 = scmp.eq.s32.totalorder %s20, 1
    %p204 = por %p202, %p203
    %p205 = scmp.ne.s32.totalorder %s196, %s197
    %p206 = scmp.eq.s32.totalorder %s20, 0
    %p207 = por %p205, %p206
    %p208 = scmp.ne.s32.totalorder %s196, %s197
    %p209 = scmp.eq.s32.totalorder %s21, 1
    %p210 = por %p208, %p209
    %p212 = scmp.ne.s32.totalorder %s197, %s211
    %p213 = scmp.eq.s32.totalorder %s21, 0
    %p214 = por %p212, %p213
    %s216 = sadd.s32 %s215, 1
    %p219 = scmp.eq.s32.totalorder %s15, 1
    %p220 = scmp.ne.s32.totalorder %s215, %s217
    %p221 = scmp.eq.s32.totalorder %s15, 0
    %p222 = por %p220, %p221
    %p223 = scmp.ne.s32.totalorder %s215, %s217
    %p224 = scmp.eq.s32.totalorder %s20, 1
    %p225 = por %p223, %p224
    %p226 = scmp.ne.s32.totalorder %s217, %s218
    %p227 = scmp.eq.s32.totalorder %s20, 0
    %p228 = por %p226, %p227
    %p229 = scmp.ne.s32.totalorder %s217, %s218
    %p230 = scmp.eq.s32.totalorder %s21, 1
    %p231 = por %p229, %p230
    %p233 = scmp.ne.s32.totalorder %s218, %s232
    %p234 = scmp.eq.s32.totalorder %s21, 0
    %p235 = por %p233, %p234
    %s237 = sadd.s32 %s236, 1
    %p240 = scmp.eq.s32.totalorder %s15, 1
    %p241 = scmp.ne.s32.totalorder %s236, %s238
    %p242 = scmp.eq.s32.totalorder %s15, 0
    %p243 = por %p241, %p242
    %p244 = scmp.ne.s32.totalorder %s236, %s238
    %p245 = scmp.eq.s32.totalorder %s20, 1
    %p246 = por %p244, %p245
    %p247 = scmp.ne.s32.totalorder %s238, %s239
    %p248 = scmp.eq.s32.totalorder %s20, 0
    %p249 = por %p247, %p248
    %p250 = scmp.ne.s32.totalorder %s238, %s239
    %p251 = scmp.eq.s32.totalorder %s21, 1
    %p252 = por %p250, %p251
    %p254 = scmp.ne.s32.totalorder %s239, %s253
    %p255 = scmp.eq.s32.totalorder %s21, 0
    %p256 = por %p254, %p255
    %s257 = ssub.s32 %s22, %s34
    %p258 = scmp.eq.s32.totalorder %s257, 0
    %s260 = sadd.s32 %s259, 1
    %s261 = scalar_select %p258, %s259, %s260
    %p264 = pneg %p258
    %p265 = scmp.eq.s32.totalorder %s15, 1
    %p266 = por %p264, %p265
    %p267 = scmp.ne.s32.totalorder %s259, %s262
    %p268 = scmp.eq.s32.totalorder %s15, 0
    %p269 = por %p267, %p268
    %p270 = scmp.ne.s32.totalorder %s259, %s262
    %p271 = scmp.eq.s32.totalorder %s20, 1
    %p272 = por %p270, %p271
    %p273 = scmp.ne.s32.totalorder %s262, %s263
    %p274 = scmp.eq.s32.totalorder %s20, 0
    %p275 = por %p273, %p274
    %p276 = scmp.ne.s32.totalorder %s262, %s263
    %p277 = scmp.eq.s32.totalorder %s21, 1
    %p278 = por %p276, %p277
    %p280 = scmp.ne.s32.totalorder %s263, %s279
    %p281 = scmp.eq.s32.totalorder %s21, 0
    %p282 = por %p280, %p281
    %p283 = scmp.le.s32.totalorder 1, %s15
    %p284 = scmp.lt.s32.totalorder %s15, 3
    %p285 = pnand %p283, %p284
    %p286 = pneg %p285
    // Predicated region
    $region9: #{fastspeech_loss.1} parent=5 // pred_check
      _
    $region10: #{fastspeech_loss.1} parent=5 // pred_check_branch
      %288 = sbr.rel (%p285) target = $region12
    $region11: #{fastspeech_loss.1} parent=5 // pred_region
      %s289 = ssub.s32 %s15, 1
      // Predicated region
      $region13: #{fastspeech_loss.1} parent=11 // pred_check
        %p290 = pneg %p144
      $region14: #{fastspeech_loss.1} parent=11 // pred_check_branch
        %292 = sbr.rel (%p290) target = $region16
      $region15: #{fastspeech_loss.1} parent=11 // pred_region
        _
      $region16: #{fastspeech_loss.1} parent=11 // pred_fallthru
        _
      // Predicated region
      $region17: #{fastspeech_loss.1} parent=11 // pred_check
        %p293 = pneg %p165
      $region18: #{fastspeech_loss.1} parent=11 // pred_check_branch
        %295 = sbr.rel (%p293) target = $region20
      $region19: #{fastspeech_loss.1} parent=11 // pred_region
        _
      $region20: #{fastspeech_loss.1} parent=11 // pred_fallthru
        _
      // Predicated region
      $region21: #{fastspeech_loss.1} parent=11 // pred_check
        %p296 = pneg %p186
      $region22: #{fastspeech_loss.1} parent=11 // pred_check_branch
        %298 = sbr.rel (%p296) target = $region24
      $region23: #{fastspeech_loss.1} parent=11 // pred_region
        _
      $region24: #{fastspeech_loss.1} parent=11 // pred_fallthru
        _
      // Predicated region
      $region25: #{fastspeech_loss.1} parent=11 // pred_check
        %p299 = pneg %p207
      $region26: #{fastspeech_loss.1} parent=11 // pred_check_branch
        %301 = sbr.rel (%p299) target = $region28
      $region27: #{fastspeech_loss.1} parent=11 // pred_region
        _
      $region28: #{fastspeech_loss.1} parent=11 // pred_fallthru
        _
      // Predicated region
      $region29: #{fastspeech_loss.1} parent=11 // pred_check
        %p302 = pneg %p228
      $region30: #{fastspeech_loss.1} parent=11 // pred_check_branch
        %304 = sbr.rel (%p302) target = $region32
      $region31: #{fastspeech_loss.1} parent=11 // pred_region
        _
      $region32: #{fastspeech_loss.1} parent=11 // pred_fallthru
        _
      // Predicated region
      $region33: #{fastspeech_loss.1} parent=11 // pred_check
        %p305 = pneg %p249
      $region34: #{fastspeech_loss.1} parent=11 // pred_check_branch
        %307 = sbr.rel (%p305) target = $region36
      $region35: #{fastspeech_loss.1} parent=11 // pred_region
        _
      $region36: #{fastspeech_loss.1} parent=11 // pred_fallthru
        _
    $region12: #{fastspeech_loss.1} parent=5 // pred_fallthru
      _
    %p308 = scmp.lt.s32.totalorder %s15, 2
    // Predicated region
    $region37: #{fastspeech_loss.1} parent=5 // pred_check
      %p309 = pneg %p308
    $region38: #{fastspeech_loss.1} parent=5 // pred_check_branch
      %311 = sbr.rel (%p309) target = $region40
    $region39: #{fastspeech_loss.1} parent=5 // pred_region
      // Predicated region
      $region41: #{fastspeech_loss.1} parent=39 // pred_check
        %p312 = pneg %p53
      $region42: #{fastspeech_loss.1} parent=39 // pred_check_branch
        %314 = sbr.rel (%p312) target = $region44
      $region43: #{fastspeech_loss.1} parent=39 // pred_region
        %s315 = sadd.s32 %s22, %s23
        %p316 = scmp.lt.s32.totalorder %s315, 0
        %s317 = scalar_select %p316, %s315, 0
        %s318 = smul.u32 2, %s317
        %s319 = ssub.s32 1, %s318
        %s320 = smul.u32 64, %s319
        %p321 = scmp.lt.s32.totalorder %s318, 0
        %s322 = scalar_select %p321, %s318, 0
        %s323 = smul.addr %s322, 4
        %s324 = scalar_lea.vmem %s0, %s323
        %s325 = sadd.s32 %s22, %s23
        %p326 = scmp.lt.s32.totalorder %s325, 0
        %s327 = scalar_select %p326, %s325, 0
        %s328 = smul.u32 2, %s327
        %s329 = ssub.s32 1, %s328
        %s330 = smul.u32 64, %s329
      $region44: #{fastspeech_loss.1} parent=39 // pred_fallthru
        _
      // Predicated region
      $region45: #{fastspeech_loss.1} parent=39 // pred_check
        %p331 = pneg %p85
      $region46: #{fastspeech_loss.1} parent=39 // pred_check_branch
        %333 = sbr.rel (%p331) target = $region48
      $region47: #{fastspeech_loss.1} parent=39 // pred_region
        %s334 = sadd.s32 %s22, %s23
        %p335 = scmp.lt.s32.totalorder %s334, 0
        %s336 = scalar_select %p335, %s334, 0
        %s337 = smul.u32 2, %s336
        %s338 = ssub.s32 1, %s337
        %s339 = smul.u32 64, %s338
        %p340 = scmp.lt.s32.totalorder %s337, 0
        %s341 = scalar_select %p340, %s337, 0
        %s342 = smul.addr %s341, 4
        %s343 = scalar_lea.vmem %s1, %s342
        %s344 = sadd.s32 %s22, %s23
        %p345 = scmp.lt.s32.totalorder %s344, 0
        %s346 = scalar_select %p345, %s344, 0
        %s347 = smul.u32 2, %s346
        %s348 = ssub.s32 1, %s347
        %s349 = smul.u32 64, %s348
      $region48: #{fastspeech_loss.1} parent=39 // pred_fallthru
        _
      // Predicated region
      $region49: #{fastspeech_loss.1} parent=39 // pred_check
        %p350 = pneg %p117
      $region50: #{fastspeech_loss.1} parent=39 // pred_check_branch
        %352 = sbr.rel (%p350) target = $region52
      $region51: #{fastspeech_loss.1} parent=39 // pred_region
        %s353 = sadd.s32 %s22, %s23
        %p354 = scmp.lt.s32.totalorder %s353, 0
        %s355 = scalar_select %p354, %s353, 0
        %s356 = smul.u32 2, %s355
        %s357 = ssub.s32 1, %s356
        %s358 = smul.u32 64, %s357
        %p359 = scmp.lt.s32.totalorder %s356, 0
        %s360 = scalar_select %p359, %s356, 0
        %s361 = smul.addr %s360, 4
        %s362 = scalar_lea.vmem %s2, %s361
        %s363 = sadd.s32 %s22, %s23
        %p364 = scmp.lt.s32.totalorder %s363, 0
        %s365 = scalar_select %p364, %s363, 0
        %s366 = smul.u32 2, %s365
        %s367 = ssub.s32 1, %s366
        %s368 = smul.u32 64, %s367
      $region52: #{fastspeech_loss.1} parent=39 // pred_fallthru
        _
    $region40: #{fastspeech_loss.1} parent=5 // pred_fallthru
      _
    %p369 = scmp.le.s32.totalorder 1, %s15
    %p370 = scmp.lt.s32.totalorder %s15, 3
    %p371 = pnand %p369, %p370
    %p372 = pneg %p371
    // Predicated region
    $region53: #{fastspeech_loss.1} parent=5 // pred_check
      _
    $region54: #{fastspeech_loss.1} parent=5 // pred_check_branch
      %374 = sbr.rel (%p371) target = $region56
    $region55: #{fastspeech_loss.1} parent=5 // pred_region
      %s375 = ssub.s32 %s15, 1
      %s376 = sadd.s32 %s24, %s25
      %p377 = scmp.lt.s32.totalorder %s376, 0
      %s378 = scalar_select %p377, %s376, 0
      %s379 = smul.u32 2, %s378
      %s380 = ssub.s32 1, %s379
      %s381 = smul.u32 64, %s380
      %p382 = scmp.lt.s32.totalorder %s379, 0
      %s383 = scalar_select %p382, %s379, 0
      %s384 = smul.addr %s383, 4
      %s385 = scalar_lea.vmem %s0, %s384
      %p386 = pneg %p59
      %p387 = pneg %p56
      %s388 = sadd.s32 %s24, %s25
      %p389 = scmp.lt.s32.totalorder %s388, 0
      %s390 = scalar_select %p389, %s388, 0
      %s391 = smul.u32 2, %s390
      %s392 = ssub.s32 1, %s391
      %s393 = smul.u32 64, %s392
      %p394 = scmp.lt.s32.totalorder %s391, 0
      %s395 = scalar_select %p394, %s391, 0
      %s396 = smul.addr %s395, 4
      %s397 = scalar_lea.vmem %s1, %s396
      %p398 = pneg %p91
      %p399 = pneg %p88
      %s400 = sadd.s32 %s24, %s25
      %p401 = scmp.lt.s32.totalorder %s400, 0
      %s402 = scalar_select %p401, %s400, 0
      %s403 = smul.u32 2, %s402
      %s404 = ssub.s32 1, %s403
      %s405 = smul.u32 64, %s404
      %p406 = scmp.lt.s32.totalorder %s403, 0
      %s407 = scalar_select %p406, %s403, 0
      %s408 = smul.addr %s407, 4
      %s409 = scalar_lea.vmem %s2, %s408
      %p410 = pneg %p123
      %p411 = pneg %p120
      %p412 = pneg %p144
      %p413 = pneg %p141
      %p414 = pneg %p165
      %p415 = pneg %p162
      %p416 = pneg %p186
      %p417 = pneg %p183
      %p418 = pneg %p207
      %p419 = pneg %p204
      %p420 = pneg %p228
      %p421 = pneg %p225
      %p422 = pneg %p249
      %p423 = pneg %p246
      %p424 = pneg %p275
      %p425 = pneg %p272
      %p426 = scmp.lt.s32.totalorder %s24, 1
      %s427 = scalar_select %p426, %s24, 1
      %s428 = smul.addr %s427, 5
      %s429 = smul.addr %s428, 8
      %s430 = scalar_lea.vmem %s9, %s429
      %s431 = sadd.s32 %s24, %s25
      %p432 = scmp.lt.s32.totalorder %s431, 0
      %s433 = scalar_select %p432, %s431, 0
      %s434 = smul.u32 2, %s433
      %s435 = ssub.s32 1, %s434
      %s436 = smul.u32 64, %s435
      %p437 = scmp.lt.s32.totalorder %s434, 0
      %s438 = scalar_select %p437, %s434, 0
      %s439 = smul.addr %s438, 4
      %s440 = scalar_lea.vmem %s0, %s439
      %s441 = sadd.s32 %s24, %s25
      %p442 = scmp.lt.s32.totalorder %s441, 0
      %s443 = scalar_select %p442, %s441, 0
      %s444 = smul.u32 2, %s443
      %s445 = ssub.s32 1, %s444
      %s446 = smul.u32 64, %s445
      %s447 = sadd.s32 %s24, %s25
      %p448 = scmp.lt.s32.totalorder %s447, 0
      %s449 = scalar_select %p448, %s447, 0
      %s450 = smul.u32 2, %s449
      %s451 = ssub.s32 1, %s450
      %s452 = smul.u32 64, %s451
      %p453 = scmp.lt.s32.totalorder %s450, 0
      %s454 = scalar_select %p453, %s450, 0
      %s455 = smul.addr %s454, 4
      %s456 = scalar_lea.vmem %s1, %s455
      %s457 = sadd.s32 %s24, %s25
      %p458 = scmp.lt.s32.totalorder %s457, 0
      %s459 = scalar_select %p458, %s457, 0
      %s460 = smul.u32 2, %s459
      %s461 = ssub.s32 1, %s460
      %s462 = smul.u32 64, %s461
      %s463 = sadd.s32 %s24, %s25
      %p464 = scmp.lt.s32.totalorder %s463, 0
      %s465 = scalar_select %p464, %s463, 0
      %s466 = smul.u32 2, %s465
      %s467 = ssub.s32 1, %s466
      %s468 = smul.u32 64, %s467
      %p469 = scmp.lt.s32.totalorder %s466, 0
      %s470 = scalar_select %p469, %s466, 0
      %s471 = smul.addr %s470, 4
      %s472 = scalar_lea.vmem %s2, %s471
      %s473 = sadd.s32 %s24, %s25
      %p474 = scmp.lt.s32.totalorder %s473, 0
      %s475 = scalar_select %p474, %s473, 0
      %s476 = smul.u32 2, %s475
      %s477 = ssub.s32 1, %s476
      %s478 = smul.u32 64, %s477
      %p479 = scmp.lt.s32.totalorder %s24, 1
      %s480 = scalar_select %p479, %s24, 1
      %s481 = smul.addr %s480, 5
      %s482 = smul.addr %s481, 8
      %s483 = scalar_lea.vmem %s9, %s482
      %p484 = scmp.eq.s32.totalorder %s25, 0
      // Predicated region
      $region57: #{fastspeech_loss.1} parent=55 // pred_check
        %p485 = pneg %p484
      $region58: #{fastspeech_loss.1} parent=55 // pred_check_branch
        %487 = sbr.rel (%p485) target = $region60
      $region59: #{fastspeech_loss.1} parent=55 // pred_region
        %488 = vst [vmem:[#allocation2] sm:$0xff] 0.0
        %489 = vst [vmem:[#allocation3] sm:$0xff] 0.0
      $region60: #{fastspeech_loss.1} parent=55 // pred_fallthru
        _
      %s490 = sadd.s32 %s24, %s25
      %s491 = smul.u32 %s490, 8
      %s492 = ssub.s32 4, %s491
      %v493 = vlaneseq
      %v494 = vshrl.u32 %v493, 7
      %v495 = vstv %s492
      %vm496 = vcmp.lt.s32.totalorder %v494, %v495
      %v497 = vld [vmem:[%s472] sm:$0xff]
      %v498 = vld [vmem:[%s440] sm:$0xff]
      %v499 = vsub.f32 %v498, %v497
      %v500 = vmul.f32 %v499, %v499
      %v501 = vsel %vm496, %v500, 0.0
      %v502 = vld [vmem:[#allocation2] sm:$0xff]
      %v503 = vadd.f32 %v501, 0.0
      %v504 = vadd.f32 %v502, %v503
      %505 = vst [vmem:[#allocation2] sm:$0xff] %v504
      %v506 = vld [vmem:[%s456] sm:$0xff]
      %v507 = vsub.f32 %v506, %v497
      %v508 = vmul.f32 %v507, %v507
      %v509 = vsel %vm496, %v508, 0.0
      %v510 = vld [vmem:[#allocation3] sm:$0xff]
      %v511 = vadd.f32 %v509, 0.0
      %v512 = vadd.f32 %v510, %v511
      %513 = vst [vmem:[#allocation3] sm:$0xff] %v512
      // Predicated region
      $region61: #{fastspeech_loss.1} parent=55 // pred_check
        %p514 = pneg %p484
      $region62: #{fastspeech_loss.1} parent=55 // pred_check_branch
        %516 = sbr.rel (%p514) target = $region64
      $region63: #{fastspeech_loss.1} parent=55 // pred_region
        %v517 = vld [vmem:[#allocation2] sm:$0xff]
        %518 = vst [vmem:[%s483] sm:$0xff] %v517
        %v519 = vld [vmem:[#allocation3] sm:$0xff]
        %s520 = scalar_lea.vmem %s483, 8
        %521 = vst [vmem:[%s520] sm:$0xff] %v519
        %v522 = vld [vmem:[%s3] sm:$0x3]
        %v523 = vld [vmem:[%s4] sm:$0x3]
        %v524 = vcvt.s32.f32 %v523
        %v525 = vsub.f32 %v522, %v524
        %v526 = vand.u32 2147483647, %v525
        %vm527 = vcmask 58368
        %v528 = vsel %vm527, %v526, 0.0
        %529 = vadd.xlane.f32.xlu0 %v528
        %v530 = vpop.xlane.xlu0 %529
        %v531 = vrot.slane %v530, 4
        %v532 = vadd.f32 %v530, %v531
        %v533 = vrot.slane %v532, 2
        %v534 = vadd.f32 %v532, %v533
        %v535 = vrot.slane %v534, 1
        %v536 = vadd.f32 %v534, %v535
        %s537 = vtos %v536
        %v538 = vstv %s537
        %s539 = scalar_lea.vmem %s483, 16
        %540 = vst [vmem:[%s539] sm:$0xff] %v538
        %v541 = vld [vmem:[%s5] sm:$0x3]
        %v542 = vld [vmem:[%s6] sm:$0x3]
        %v543 = vsub.f32 %v541, %v542
        %v544 = vmul.f32 %v543, %v543
        %v545 = vsel %vm527, %v544, 0.0
        %546 = vadd.xlane.f32.xlu0 %v545
        %v547 = vpop.xlane.xlu0 %546
        %v548 = vrot.slane %v547, 4
        %v549 = vadd.f32 %v547, %v548
        %v550 = vrot.slane %v549, 2
        %v551 = vadd.f32 %v549, %v550
        %v552 = vrot.slane %v551, 1
        %v553 = vadd.f32 %v551, %v552
        %s554 = vtos %v553
        %v555 = vstv %s554
        %s556 = scalar_lea.vmem %s483, 24
        %557 = vst [vmem:[%s556] sm:$0xff] %v555
        %v558 = vld [vmem:[%s7] sm:$0x3]
        %v559 = vld [vmem:[%s8] sm:$0x3]
        %v560 = vsub.f32 %v558, %v559
        %v561 = vmul.f32 %v560, %v560
        %v562 = vsel %vm527, %v561, 0.0
        %563 = vadd.xlane.f32.xlu0 %v562
        %v564 = vpop.xlane.xlu0 %563
        %v565 = vrot.slane %v564, 4
        %v566 = vadd.f32 %v564, %v565
        %v567 = vrot.slane %v566, 2
        %v568 = vadd.f32 %v566, %v567
        %v569 = vrot.slane %v568, 1
        %v570 = vadd.f32 %v568, %v569
        %s571 = vtos %v570
        %v572 = vstv %s571
        %s573 = scalar_lea.vmem %s483, 32
        %574 = vst [vmem:[%s573] sm:$0xff] %v572
      $region64: #{fastspeech_loss.1} parent=55 // pred_fallthru
        _
      %p575 = scmp.lt.s32.totalorder %s24, 1
      %s576 = scalar_select %p575, %s24, 1
      %s577 = smul.addr %s576, 5
      %s578 = smul.addr %s577, 8
      %s579 = scalar_lea.vmem %s9, %s578
      // Predicated region
      $region65: #{fastspeech_loss.1} parent=55 // pred_check
        %p580 = pneg %p272
      $region66: #{fastspeech_loss.1} parent=55 // pred_check_branch
        %582 = sbr.rel (%p580) target = $region68
      $region67: #{fastspeech_loss.1} parent=55 // pred_region
        _
      $region68: #{fastspeech_loss.1} parent=55 // pred_fallthru
        _
    $region56: #{fastspeech_loss.1} parent=5 // pred_fallthru
      _
    %p583 = scmp.le.s32.totalorder 2, %s15
    // Predicated region
    $region69: #{fastspeech_loss.1} parent=5 // pred_check
      %p584 = pneg %p583
    $region70: #{fastspeech_loss.1} parent=5 // pred_check_branch
      %586 = sbr.rel (%p584) target = $region72
    $region71: #{fastspeech_loss.1} parent=5 // pred_region
      %s587 = ssub.s32 %s15, 2
      // Predicated region
      $region73: #{fastspeech_loss.1} parent=71 // pred_check
        %p588 = pneg %p278
      $region74: #{fastspeech_loss.1} parent=71 // pred_check_branch
        %590 = sbr.rel (%p588) target = $region76
      $region75: #{fastspeech_loss.1} parent=71 // pred_region
        %p591 = scmp.lt.s32.totalorder %s26, 1
        %s592 = scalar_select %p591, %s26, 1
        %s593 = smul.addr %s592, 5
        %s594 = smul.addr %s593, 8
        %s595 = scalar_lea.vmem %s9, %s594
      $region76: #{fastspeech_loss.1} parent=71 // pred_fallthru
        _
    $region72: #{fastspeech_loss.1} parent=5 // pred_fallthru
      _
  $region6: #{fastspeech_loss.1} parent=0 // loop_footer
    %s19 = sadd.s32 1, %s15
  $region7: #{fastspeech_loss.1} parent=0 // loop_footer_branch
    %14 = sbr.rel target = $region3
  $region8: #{fastspeech_loss.1} parent=0 // loop_exit
    _

</llo_original>
